<compile_context>
chip_gen: v7x
topology: tpu7x:2x2x1
jax: 0.10.0
libtpu: 0.0.40
codegen_flags: <defaults>
</compile_context>

<pallas_src>
import functools

import jax
import jax.numpy as jnp
from jax import lax
from jax.experimental import pallas as pl
from jax.experimental.pallas import tpu as pltpu


def _round_up(x, m):
    return ((x + m - 1) // m) * m


def _pad2(x, rows, cols):
    return jnp.pad(x, ((0, rows - x.shape[0]), (0, cols - x.shape[1])))


# --------------------------------------------------------------------------------
# Shared in-kernel pieces
# --------------------------------------------------------------------------------
def _mlp_and_head(obs, w_refs, num_net_layers, out_dim, head_pad):
    """MLP trunk (ReLU after every layer) + fused dueling head -> (h, q, col, adv_mask)."""
    h = obs  # (rows, IN_PAD) bf16 on first layer, f32 afterwards
    for li in range(num_net_layers):
        w = w_refs[2 * li][...]                     # (in_p, hid_p) bf16
        b = w_refs[2 * li + 1][...]                 # (1, hid_p)    f32
        z = jnp.dot(h.astype(jnp.bfloat16), w,
                    preferred_element_type=jnp.float32) + b
        h = jnp.maximum(z, 0.0)                     # f32

    # Fused dueling head: cols [0, out_dim) hold advantage, col head_pad-1 holds value.
    w_head = w_refs[2 * num_net_layers][...]        # (hid_p, head_pad) bf16
    b_head = w_refs[2 * num_net_layers + 1][...]    # (1, head_pad)     f32
    head = jnp.dot(h.astype(jnp.bfloat16), w_head,
                   preferred_element_type=jnp.float32) + b_head

    col = lax.broadcasted_iota(jnp.int32, head.shape, 1)
    adv_mask = col < out_dim
    adv_mean = jnp.sum(jnp.where(adv_mask, head, 0.0),
                       axis=-1, keepdims=True) * (1.0 / out_dim)
    value = jnp.sum(jnp.where(col == head_pad - 1, head, 0.0),
                    axis=-1, keepdims=True)         # (rows, 1)
    q = jnp.where(adv_mask, value + head - adv_mean, 0.0)   # padded cols -> 0 (finite)
    return h, q, col, adv_mask


def _legal_q_head(q, qmin, legal, act, col, out_dim, head_pad):
    """legal_q = (1 + q - qmin) * legal ; pack greedy/actual_q/greedy_q in padded cols."""
    legal_q = (1.0 + q - qmin) * legal
    max_v = jnp.max(legal_q, axis=-1, keepdims=True)          # greedy_q (row max)
    is_max = legal_q == max_v
    # First maximal index, in f32 (column ids << 2^24 are exact in f32).
    greedy_f = jnp.min(
        jnp.where(is_max, col.astype(jnp.float32), jnp.float32(head_pad)),
        axis=-1, keepdims=True)
    actual = jnp.sum(jnp.where(col == act, legal_q, 0.0),
                     axis=-1, keepdims=True)                   # gather(-1, actions)

    out = jnp.where(col < out_dim, legal_q, 0.0)
    out = jnp.where(col == head_pad - 3, greedy_f, out)        # greedy action (as f32)
    out = jnp.where(col == head_pad - 2, actual, out)          # actual_q
    out = jnp.where(col == head_pad - 1, max_v, out)           # greedy_q
    return out


# --------------------------------------------------------------------------------
# Fused single-kernel path (small batch): trunk + head + global min + legal-q head
# --------------------------------------------------------------------------------
def _fused_kernel(num_net_layers, out_dim, head_pad, b_valid, with_enc, *refs):
    n_w = 2 * num_net_layers + 2
    obs_ref = refs[0]
    w_refs = refs[1:1 + n_w]
    legal_ref = refs[1 + n_w]
    act_ref = refs[2 + n_w]
    out_refs = refs[3 + n_w:]
    if with_enc:
        enc_ref, out_ref = out_refs
    else:
        (out_ref,) = out_refs

    h, q, col, adv_mask = _mlp_and_head(obs_ref[...], w_refs,
                                        num_net_layers, out_dim, head_pad)

    # Global q.min() over valid rows/cols (a single tile covers the whole batch).
    row = lax.broadcasted_iota(jnp.int32, q.shape, 0)
    qmin = jnp.min(jnp.where(adv_mask & (row < b_valid), q, jnp.inf))

    legal = legal_ref[...].astype(jnp.float32)
    act = act_ref[...]                                          # (rows, 1) int32
    if with_enc:
        enc_ref[...] = h
    out_ref[...] = _legal_q_head(q, qmin, legal, act, col, out_dim, head_pad)


# --------------------------------------------------------------------------------
# Two-pass path (large batch)
# Pass 1: MLP trunk + fused dueling head -> raw q + per-tile partial min (+ encoding)
# --------------------------------------------------------------------------------
def _trunk_kernel(num_net_layers, out_dim, head_pad, bt, b_valid, with_enc, *refs):
    n_w = 2 * num_net_layers + 2
    obs_ref = refs[0]
    w_refs = refs[1:1 + n_w]
    out_refs = refs[1 + n_w:]
    if with_enc:
        enc_ref, q_ref, pmin_ref = out_refs
    else:
        q_ref, pmin_ref = out_refs

    h, q, _, adv_mask = _mlp_and_head(obs_ref[...], w_refs,
                                      num_net_layers, out_dim, head_pad)

    # Per-tile partial min over VALID rows/cols only (padded batch rows excluded).
    row = pl.program_id(0) * bt + lax.broadcasted_iota(jnp.int32, q.shape, 0)
    valid = adv_mask & (row < b_valid)
    tile_min = jnp.min(jnp.where(valid, q, jnp.inf))

    if with_enc:
        enc_ref[...] = h
    q_ref[...] = q
    pmin_ref[...] = jnp.broadcast_to(tile_min, pmin_ref.shape)


# --------------------------------------------------------------------------------
# Pass 2: legal-q masking, argmax, gathers (global min arrives as an SMEM scalar)
# --------------------------------------------------------------------------------
def _qhead_kernel(out_dim, head_pad, qmin_ref, q_ref, legal_ref, act_ref, out_ref):
    qmin = qmin_ref[0]
    q = q_ref[...]                                              # (BT, HP) f32
    legal = legal_ref[...].astype(jnp.float32)                  # exact 0/1 mask
    act = act_ref[...]                                          # (BT, 1) int32
    col = lax.broadcasted_iota(jnp.int32, q.shape, 1)
    out_ref[...] = _legal_q_head(q, qmin, legal, act, col, out_dim, head_pad)


# --------------------------------------------------------------------------------
# Parameter init (torch-Linear-like uniform, weights stored pre-transposed (in, out))
# --------------------------------------------------------------------------------
def init_dqn_params(key, in_dim, out_dim, hidden_dim, depth):
    params = {"net": [], "value": None, "advantage": None}

    def linear(key, fan_in, fan_out):
        kw, kb = jax.random.split(key)
        bound = 1.0 / jnp.sqrt(jnp.float32(fan_in))
        w = jax.random.uniform(kw, (fan_in, fan_out), jnp.float32, -bound, bound)
        b = jax.random.uniform(kb, (fan_out,), jnp.float32, -bound, bound)
        return w, b

    dims = [in_dim] + [hidden_dim] * depth + [hidden_dim]
    keys = jax.random.split(key, len(dims) + 1)
    for li in range(len(dims) - 1):
        params["net"].append(linear(keys[li], dims[li], dims[li + 1]))
    kv, ka = jax.random.split(keys[-1])
    params["value"] = linear(kv, hidden_dim, 1)
    params["advantage"] = linear(ka, hidden_dim, out_dim)
    return params


# --------------------------------------------------------------------------------
# One-time weight preprocessing: pad feature dims, cast bf16, assemble fused head.
# Call once and reuse across forwards — removes a weight-sized HBM round trip per step.
# --------------------------------------------------------------------------------
def prepare_dqn_params(params):
    f32 = jnp.float32
    in_dim = params["net"][0][0].shape[0]
    hidden_dim = params["net"][0][0].shape[1]
    out_dim = params["advantage"][0].shape[1]
    num_net_layers = len(params["net"])
    depth = num_net_layers - 1

    in_pad = _round_up(max(in_dim, 1), 128)
    hid_pad = _round_up(hidden_dim, 128)
    # +3 guarantees 3 spare padded columns for packing greedy/actual_q/greedy_q,
    # and a slot (head_pad-1) for the fused value column.
    head_pad = _round_up(out_dim + 3, 128)

    weights = []
    pads_in = [in_pad] + [hid_pad] * depth
    for li, (w, b) in enumerate(params["net"]):
        wp = _pad2(w.astype(f32), pads_in[li], hid_pad).astype(jnp.bfloat16)
        bp = _pad2(b.reshape(1, -1).astype(f32), 1, hid_pad)
        weights += [wp, bp]

    # Fused dueling head: one (hidden, head_pad) matrix; value weight in last column.
    wv, bv = params["value"]       # wv: (hidden, 1), bv: (1,)
    wa, ba = params["advantage"]   # wa: (hidden, out_dim), ba: (out_dim,)
    w_head = jnp.zeros((hidden_dim, head_pad), f32)
    w_head = w_head.at[:, :out_dim].set(wa.astype(f32))
    w_head = w_head.at[:, head_pad - 1].set(wv[:, 0].astype(f32))
    w_head = _pad2(w_head, hid_pad, head_pad).astype(jnp.bfloat16)
    b_head = jnp.zeros((1, head_pad), f32)
    b_head = b_head.at[0, :out_dim].set(ba.astype(f32))
    b_head = b_head.at[0, head_pad - 1].set(bv[0].astype(f32))
    weights += [w_head, b_head]

    return {
        "weights": tuple(weights),
        "in_dim": in_dim, "out_dim": out_dim, "hidden_dim": hidden_dim,
        "depth": depth, "num_net_layers": num_net_layers,
        "in_pad": in_pad, "hid_pad": hid_pad, "head_pad": head_pad,
    }


# --------------------------------------------------------------------------------
# Forward wrapper (mirrors DQNPolicy.forward for one_step 2-D inputs)
# --------------------------------------------------------------------------------
def dqn_forward(prepared, observation, legal_actions, actions, *,
                with_state_encoding=True, fuse_max_rows=512, tile_rows=None):
    f32 = jnp.float32
    B, _ = observation.shape
    out_dim = prepared["out_dim"]
    hidden_dim = prepared["hidden_dim"]
    num_net_layers = prepared["num_net_layers"]
    IN_PAD, HID_PAD, HEAD_PAD = prepared["in_pad"], prepared["hid_pad"], prepared["head_pad"]
    weights = prepared["weights"]

    B16 = _round_up(B, 16)   # bf16 inputs -> 16-row (sublane-pair) granularity
    fused = (tile_rows is None) and (B16 <= fuse_max_rows)

    if fused:
        # ---------- single-kernel fast path (one launch, no intermediate q slab) ----------
        B_PAD = B16
        obs = _pad2(observation.astype(jnp.bfloat16), B_PAD, IN_PAD)
        legal = _pad2(legal_actions.astype(jnp.bfloat16), B_PAD, HEAD_PAD)
        act = jnp.pad(actions.astype(jnp.int32).reshape(B, 1), ((0, B_PAD - B), (0, 0)))

        out_shapes = []
        if with_state_encoding:
            out_shapes.append(jax.ShapeDtypeStruct((B_PAD, HID_PAD), f32))
        out_shapes.append(jax.ShapeDtypeStruct((B_PAD, HEAD_PAD), f32))

        outs = pl.pallas_call(
            functools.partial(_fused_kernel, num_net_layers, out_dim, HEAD_PAD, B,
                              with_state_encoding),
            out_shape=tuple(out_shapes),
            compiler_params=pltpu.CompilerParams(vmem_limit_bytes=64 * 1024 * 1024),
        )(obs, *weights, legal, act)

        if with_state_encoding:
            enc_pad, out_pad = outs
        else:
            (out_pad,) = outs
            enc_pad = None
    else:
        # ---------- two-pass batch-tiled path (large batch) ----------
        if tile_rows is not None:
            BT = max(_round_up(tile_rows, 16), 16)
        else:
            # Target fat tiles (up to 1024 rows) but keep >= 2 tiles so the "parallel"
            # batch axis shards across both v7x TensorCores (no-op on v5e/v6e).
            BT = min(1024, max(16, _round_up((B16 + 1) // 2, 16)))
        B_PAD = _round_up(B, BT)
        num_tiles = B_PAD // BT
        grid = (num_tiles,)

        obs = _pad2(observation.astype(jnp.bfloat16), B_PAD, IN_PAD)
        legal = _pad2(legal_actions.astype(jnp.bfloat16), B_PAD, HEAD_PAD)
        act = jnp.pad(actions.astype(jnp.int32).reshape(B, 1), ((0, B_PAD - B), (0, 0)))

        # Weight/bias blocks are grid-invariant -> VMEM-resident across grid steps.
        # TODO(synk): pipeline_mode=pl.Buffered(1) here would halve weight VMEM on v7x.
        w_specs = [pl.BlockSpec(w.shape, lambda i: (0, 0)) for w in weights]

        out_specs, out_shapes = [], []
        if with_state_encoding:
            out_specs.append(pl.BlockSpec((BT, HID_PAD), lambda i: (i, 0)))
            out_shapes.append(jax.ShapeDtypeStruct((B_PAD, HID_PAD), f32))
        out_specs += [pl.BlockSpec((BT, HEAD_PAD), lambda i: (i, 0)),
                      pl.BlockSpec((8, 128), lambda i: (i, 0))]
        out_shapes += [jax.ShapeDtypeStruct((B_PAD, HEAD_PAD), f32),
                       jax.ShapeDtypeStruct((num_tiles * 8, 128), f32)]

        flops = 2 * B_PAD * (IN_PAD * HID_PAD
                             + (num_net_layers - 1) * HID_PAD * HID_PAD
                             + HID_PAD * HEAD_PAD)
        weight_bytes = sum(int(x.size) * x.dtype.itemsize for x in weights)
        bytes_accessed = (B_PAD * IN_PAD * 2 + weight_bytes
                          + B_PAD * ((HID_PAD * 4 if with_state_encoding else 0)
                                     + HEAD_PAD * 4))

        outs1 = pl.pallas_call(
            functools.partial(_trunk_kernel, num_net_layers, out_dim, HEAD_PAD, BT, B,
                              with_state_encoding),
            grid=grid,
            in_specs=[pl.BlockSpec((BT, IN_PAD), lambda i: (i, 0))] + w_specs,
            out_specs=tuple(out_specs),
            out_shape=tuple(out_shapes),
            compiler_params=pltpu.CompilerParams(
                dimension_semantics=("parallel",),
                vmem_limit_bytes=64 * 1024 * 1024),
            cost_estimate=pl.CostEstimate(flops=flops, transcendentals=0,
                                          bytes_accessed=bytes_accessed),
        )(obs, *weights)

        if with_state_encoding:
            enc_pad, q_pad, pmins = outs1
        else:
            q_pad, pmins = outs1
            enc_pad = None

        # Global q.min() from the tiny per-tile partial-min array (a few KB, not q itself).
        qmin = jnp.min(pmins).reshape(1).astype(f32)

        out_pad = pl.pallas_call(
            functools.partial(_qhead_kernel, out_dim, HEAD_PAD),
            grid=grid,
            in_specs=[pl.BlockSpec(memory_space=pltpu.MemorySpace.SMEM),   # global min scalar
                      pl.BlockSpec((BT, HEAD_PAD), lambda i: (i, 0)),       # raw q
                      pl.BlockSpec((BT, HEAD_PAD), lambda i: (i, 0)),       # legal mask (bf16)
                      pl.BlockSpec((BT, 1), lambda i: (i, 0))],             # actions
            out_specs=pl.BlockSpec((BT, HEAD_PAD), lambda i: (i, 0)),
            out_shape=jax.ShapeDtypeStruct((B_PAD, HEAD_PAD), f32),
            compiler_params=pltpu.CompilerParams(dimension_semantics=("parallel",)),
        )(qmin, q_pad, legal, act)

    # ---- unpack / strip padding (matches torch forward's returned dict) ----
    # NOTE: greedy_actions is int32 (torch argmax gives int64).
    return {
        "q": out_pad[:B, :out_dim],                                  # (B, out_dim)
        "greedy_actions": out_pad[:B, HEAD_PAD - 3].astype(jnp.int32),
        "actual_q": out_pad[:B, HEAD_PAD - 2],
        "greedy_q": out_pad[:B, HEAD_PAD - 1],
        "state_encoding": (enc_pad[:B, :hidden_dim]
                           if with_state_encoding else None),
    }


if __name__ == "__main__":
    IN_DIM, OUT_DIM, HIDDEN_DIM, DEPTH = 32, 8, 32, 2
    B = 24

    key = jax.random.PRNGKey(0)
    kp, ko, kl, ka = jax.random.split(key, 4)

    params = init_dqn_params(kp, IN_DIM, OUT_DIM, HIDDEN_DIM, DEPTH)
    prepared = prepare_dqn_params(params)   # one-time weight preprocessing

    observation = jax.random.normal(ko, (B, IN_DIM), jnp.float32)
    legal_actions = (jax.random.uniform(kl, (B, OUT_DIM)) > 0.3).astype(jnp.float32)
    legal_actions = legal_actions.at[:, 0].set(1.0)   # at least one legal action per row
    actions = jax.random.randint(ka, (B,), 0, OUT_DIM, jnp.int32)

    # Fused single-kernel fast path (small batch).
    out = dqn_forward(prepared, observation, legal_actions, actions)
    jax.block_until_ready(out)

    # Two-pass batch-tiled path (force a small tile to exercise the multi-tile grid).
    out2 = dqn_forward(prepared, observation, legal_actions, actions,
                       fuse_max_rows=0, tile_rows=16)
    jax.block_until_ready(out2)

    # Shape checks.
    assert out["q"].shape == (B, OUT_DIM)
    assert out["greedy_actions"].shape == (B,)
    assert out["actual_q"].shape == (B,)
    assert out["state_encoding"].shape == (B, HIDDEN_DIM)
    assert out["greedy_q"].shape == (B,)

    # Self-consistency: greedy actions are legal, greedy_q/actual_q match q.
    assert bool(jnp.all(legal_actions[jnp.arange(B), out["greedy_actions"]] > 0))
    assert bool(jnp.allclose(out["greedy_q"], jnp.max(out["q"], axis=-1)))
    assert bool(jnp.allclose(out["actual_q"], out["q"][jnp.arange(B), actions]))

    # Fused and two-pass paths agree.
    for name in ("q", "actual_q", "greedy_q", "state_encoding"):
        assert bool(jnp.allclose(out[name], out2[name], atol=1e-5, rtol=1e-5)), name
    assert bool(jnp.all(out["greedy_actions"] == out2["greedy_actions"]))

    # Loose check against a pure-JAX f32 reference (bf16 MXU weights -> small tolerance).
    def ref_forward(p, obs, legal):
        h = obs
        for w, b in p["net"]:
            h = jax.nn.relu(h @ w + b)
        value = h @ p["value"][0] + p["value"][1]
        adv = h @ p["advantage"][0] + p["advantage"][1]
        q = value + adv - adv.mean(-1, keepdims=True)
        return (1 + q - q.min()) * legal, h

    ref_q, ref_h = ref_forward(params, observation, legal_actions)
    assert bool(jnp.allclose(out["q"], ref_q, atol=0.05, rtol=0.05))
    assert bool(jnp.allclose(out["state_encoding"], ref_h, atol=0.05, rtol=0.05))

    print("KERNEL_OK")
</pallas_src>

<mosaic_0001>
module attributes {stable_mosaic.version = 11 : i64} {
  func.func @_fused_kernel(%arg0: memref<32x128xbf16, #tpu.memory_space<vmem>>, %arg1: memref<128x128xbf16, #tpu.memory_space<vmem>>, %arg2: memref<1x128xf32, #tpu.memory_space<vmem>>, %arg3: memref<128x128xbf16, #tpu.memory_space<vmem>>, %arg4: memref<1x128xf32, #tpu.memory_space<vmem>>, %arg5: memref<128x128xbf16, #tpu.memory_space<vmem>>, %arg6: memref<1x128xf32, #tpu.memory_space<vmem>>, %arg7: memref<128x128xbf16, #tpu.memory_space<vmem>>, %arg8: memref<1x128xf32, #tpu.memory_space<vmem>>, %arg9: memref<32x128xbf16, #tpu.memory_space<vmem>>, %arg10: memref<32x1xi32, #tpu.memory_space<vmem>>, %arg11: memref<32x128xf32, #tpu.memory_space<vmem>>, %arg12: memref<32x128xf32, #tpu.memory_space<vmem>>) attributes {dimension_semantics = [], scalar_prefetch = 0 : i64, scratch_operands = 0 : i64, tpu.core_type = #tpu.core_type<tc>} {
    %c0 = arith.constant 0 : index
    %c0_0 = arith.constant 0 : index
    %0 = vector.load %arg0[%c0, %c0_0] : memref<32x128xbf16, #tpu.memory_space<vmem>>, vector<32x128xbf16>
    %c0_1 = arith.constant 0 : index
    %c0_2 = arith.constant 0 : index
    %1 = vector.load %arg1[%c0_1, %c0_2] : memref<128x128xbf16, #tpu.memory_space<vmem>>, vector<128x128xbf16>
    %c0_3 = arith.constant 0 : index
    %c0_4 = arith.constant 0 : index
    %2 = vector.load %arg2[%c0_3, %c0_4] : memref<1x128xf32, #tpu.memory_space<vmem>>, vector<1x128xf32>
    %cst = arith.constant dense<0.000000e+00> : vector<32x128xf32>
    %3 = tpu.matmul %0, %1, %cst {dimension_numbers = #tpu.dot_dimension_numbers<[1], [0], [0], [1], [0, 0, 1, 1], [], []>} : vector<32x128xbf16>, vector<128x128xbf16>, vector<32x128xf32> -> vector<32x128xf32>
    %4 = vector.broadcast %2 : vector<1x128xf32> to vector<32x128xf32>
    %5 = arith.addf %3, %4 : vector<32x128xf32>
    %cst_5 = arith.constant 0.000000e+00 : f32
    %6 = vector.broadcast %cst_5 : f32 to vector<32x128xf32>
    %7 = arith.maximumf %5, %6 : vector<32x128xf32>
    %c0_6 = arith.constant 0 : index
    %c0_7 = arith.constant 0 : index
    %8 = vector.load %arg3[%c0_6, %c0_7] : memref<128x128xbf16, #tpu.memory_space<vmem>>, vector<128x128xbf16>
    %c0_8 = arith.constant 0 : index
    %c0_9 = arith.constant 0 : index
    %9 = vector.load %arg4[%c0_8, %c0_9] : memref<1x128xf32, #tpu.memory_space<vmem>>, vector<1x128xf32>
    %10 = arith.truncf %7 : vector<32x128xf32> to vector<32x128xbf16>
    %cst_10 = arith.constant dense<0.000000e+00> : vector<32x128xf32>
    %11 = tpu.matmul %10, %8, %cst_10 {dimension_numbers = #tpu.dot_dimension_numbers<[1], [0], [0], [1], [0, 0, 1, 1], [], []>} : vector<32x128xbf16>, vector<128x128xbf16>, vector<32x128xf32> -> vector<32x128xf32>
    %12 = vector.broadcast %9 : vector<1x128xf32> to vector<32x128xf32>
    %13 = arith.addf %11, %12 : vector<32x128xf32>
    %cst_11 = arith.constant 0.000000e+00 : f32
    %14 = vector.broadcast %cst_11 : f32 to vector<32x128xf32>
    %15 = arith.maximumf %13, %14 : vector<32x128xf32>
    %c0_12 = arith.constant 0 : index
    %c0_13 = arith.constant 0 : index
    %16 = vector.load %arg5[%c0_12, %c0_13] : memref<128x128xbf16, #tpu.memory_space<vmem>>, vector<128x128xbf16>
    %c0_14 = arith.constant 0 : index
    %c0_15 = arith.constant 0 : index
    %17 = vector.load %arg6[%c0_14, %c0_15] : memref<1x128xf32, #tpu.memory_space<vmem>>, vector<1x128xf32>
    %18 = arith.truncf %15 : vector<32x128xf32> to vector<32x128xbf16>
    %cst_16 = arith.constant dense<0.000000e+00> : vector<32x128xf32>
    %19 = tpu.matmul %18, %16, %cst_16 {dimension_numbers = #tpu.dot_dimension_numbers<[1], [0], [0], [1], [0, 0, 1, 1], [], []>} : vector<32x128xbf16>, vector<128x128xbf16>, vector<32x128xf32> -> vector<32x128xf32>
    %20 = vector.broadcast %17 : vector<1x128xf32> to vector<32x128xf32>
    %21 = arith.addf %19, %20 : vector<32x128xf32>
    %cst_17 = arith.constant 0.000000e+00 : f32
    %22 = vector.broadcast %cst_17 : f32 to vector<32x128xf32>
    %23 = arith.maximumf %21, %22 : vector<32x128xf32>
    %c0_18 = arith.constant 0 : index
    %c0_19 = arith.constant 0 : index
    %24 = vector.load %arg7[%c0_18, %c0_19] : memref<128x128xbf16, #tpu.memory_space<vmem>>, vector<128x128xbf16>
    %c0_20 = arith.constant 0 : index
    %c0_21 = arith.constant 0 : index
    %25 = vector.load %arg8[%c0_20, %c0_21] : memref<1x128xf32, #tpu.memory_space<vmem>>, vector<1x128xf32>
    %26 = arith.truncf %23 : vector<32x128xf32> to vector<32x128xbf16>
    %cst_22 = arith.constant dense<0.000000e+00> : vector<32x128xf32>
    %27 = tpu.matmul %26, %24, %cst_22 {dimension_numbers = #tpu.dot_dimension_numbers<[1], [0], [0], [1], [0, 0, 1, 1], [], []>} : vector<32x128xbf16>, vector<128x128xbf16>, vector<32x128xf32> -> vector<32x128xf32>
    %28 = vector.broadcast %25 : vector<1x128xf32> to vector<32x128xf32>
    %29 = arith.addf %27, %28 : vector<32x128xf32>
    %30 = tpu.iota {dimensions = array<i32: 1>} : vector<32x128xi32>
    %c8_i32 = arith.constant 8 : i32
    %31 = vector.broadcast %c8_i32 : i32 to vector<32x128xi32>
    %32 = arith.cmpi slt, %30, %31 : vector<32x128xi32>
    %cst_23 = arith.constant 0.000000e+00 : f32
    %33 = vector.broadcast %cst_23 : f32 to vector<32x128xf32>
    %34 = arith.select %32, %29, %33 : vector<32x128xi1>, vector<32x128xf32>
    %cst_24 = arith.constant dense<0.000000e+00> : vector<32xf32>
    %35 = vector.multi_reduction <add>, %34, %cst_24 [1] : vector<32x128xf32> to vector<32xf32>
    %36 = vector.shape_cast %35 : vector<32xf32> to vector<32x1xf32>
    %cst_25 = arith.constant 1.250000e-01 : f32
    %37 = vector.broadcast %cst_25 : f32 to vector<32x1xf32>
    %38 = arith.mulf %36, %37 : vector<32x1xf32>
    %c127_i32 = arith.constant 127 : i32
    %39 = vector.broadcast %c127_i32 : i32 to vector<32x128xi32>
    %40 = arith.cmpi eq, %30, %39 : vector<32x128xi32>
    %cst_26 = arith.constant 0.000000e+00 : f32
    %41 = vector.broadcast %cst_26 : f32 to vector<32x128xf32>
    %42 = arith.select %40, %29, %41 : vector<32x128xi1>, vector<32x128xf32>
    %cst_27 = arith.constant dense<0.000000e+00> : vector<32xf32>
    %43 = vector.multi_reduction <add>, %42, %cst_27 [1] : vector<32x128xf32> to vector<32xf32>
    %44 = vector.shape_cast %43 : vector<32xf32> to vector<32x1xf32>
    %45 = vector.broadcast %44 : vector<32x1xf32> to vector<32x128xf32>
    %46 = arith.addf %45, %29 : vector<32x128xf32>
    %47 = vector.broadcast %38 : vector<32x1xf32> to vector<32x128xf32>
    %48 = arith.subf %46, %47 : vector<32x128xf32>
    %cst_28 = arith.constant 0.000000e+00 : f32
    %49 = vector.broadcast %cst_28 : f32 to vector<32x128xf32>
    %50 = arith.select %32, %48, %49 : vector<32x128xi1>, vector<32x128xf32>
    %51 = tpu.iota {dimensions = array<i32: 0>} : vector<32x128xi32>
    %c24_i32 = arith.constant 24 : i32
    %52 = vector.broadcast %c24_i32 : i32 to vector<32x128xi32>
    %53 = arith.cmpi slt, %51, %52 : vector<32x128xi32>
    %54 = arith.andi %32, %53 : vector<32x128xi1>
    %cst_29 = arith.constant 0x7F800000 : f32
    %55 = vector.broadcast %cst_29 : f32 to vector<32x128xf32>
    %56 = arith.select %54, %50, %55 : vector<32x128xi1>, vector<32x128xf32>
    %57 = vector.shape_cast %56 : vector<32x128xf32> to vector<1x32x128xf32>
    %cst_30 = arith.constant dense<0x7F800000> : vector<1xf32>
    %58 = vector.multi_reduction <minimumf>, %57, %cst_30 [1, 2] : vector<1x32x128xf32> to vector<1xf32>
    %59 = vector.shape_cast %58 : vector<1xf32> to vector<1x1x1xf32>
    %60 = vector.extract %59[0, 0, 0] : f32 from vector<1x1x1xf32>
    %c0_31 = arith.constant 0 : index
    %c0_32 = arith.constant 0 : index
    %61 = vector.load %arg9[%c0_31, %c0_32] : memref<32x128xbf16, #tpu.memory_space<vmem>>, vector<32x128xbf16>
    %62 = arith.extf %61 : vector<32x128xbf16> to vector<32x128xf32>
    %c0_33 = arith.constant 0 : index
    %c0_34 = arith.constant 0 : index
    %63 = vector.load %arg10[%c0_33, %c0_34] : memref<32x1xi32, #tpu.memory_space<vmem>>, vector<32x1xi32>
    %c0_35 = arith.constant 0 : index
    %c0_36 = arith.constant 0 : index
    %64 = vector.load %arg11[%c0_35, %c0_36] : memref<32x128xf32, #tpu.memory_space<vmem>>, vector<32x128xf32>
    tpu.vector_store %arg11[%c0_35, %c0_36], %23 {strides = array<i32>} : memref<32x128xf32, #tpu.memory_space<vmem>>, vector<32x128xf32>,
    %cst_37 = arith.constant 1.000000e+00 : f32
    %65 = vector.broadcast %cst_37 : f32 to vector<32x128xf32>
    %66 = arith.addf %65, %50 : vector<32x128xf32>
    %67 = vector.broadcast %60 : f32 to vector<32x128xf32>
    %68 = arith.subf %66, %67 : vector<32x128xf32>
    %69 = arith.mulf %68, %62 : vector<32x128xf32>
    %cst_38 = arith.constant dense<0xFF800000> : vector<32xf32>
    %70 = vector.multi_reduction <maximumf>, %69, %cst_38 [1] : vector<32x128xf32> to vector<32xf32>
    %71 = vector.shape_cast %70 : vector<32xf32> to vector<32x1xf32>
    %72 = vector.broadcast %71 : vector<32x1xf32> to vector<32x128xf32>
    %73 = arith.cmpf oeq, %69, %72 : vector<32x128xf32>
    %74 = arith.sitofp %30 : vector<32x128xi32> to vector<32x128xf32>
    %cst_39 = arith.constant 1.280000e+02 : f32
    %75 = vector.broadcast %cst_39 : f32 to vector<32x128xf32>
    %76 = arith.select %73, %74, %75 : vector<32x128xi1>, vector<32x128xf32>
    %cst_40 = arith.constant dense<0x7F800000> : vector<32xf32>
    %77 = vector.multi_reduction <minimumf>, %76, %cst_40 [1] : vector<32x128xf32> to vector<32xf32>
    %78 = vector.shape_cast %77 : vector<32xf32> to vector<32x1xf32>
    %79 = vector.broadcast %63 : vector<32x1xi32> to vector<32x128xi32>
    %80 = arith.cmpi eq, %30, %79 : vector<32x128xi32>
    %cst_41 = arith.constant 0.000000e+00 : f32
    %81 = vector.broadcast %cst_41 : f32 to vector<32x128xf32>
    %82 = arith.select %80, %69, %81 : vector<32x128xi1>, vector<32x128xf32>
    %cst_42 = arith.constant dense<0.000000e+00> : vector<32xf32>
    %83 = vector.multi_reduction <add>, %82, %cst_42 [1] : vector<32x128xf32> to vector<32xf32>
    %84 = vector.shape_cast %83 : vector<32xf32> to vector<32x1xf32>
    %c8_i32_43 = arith.constant 8 : i32
    %85 = vector.broadcast %c8_i32_43 : i32 to vector<32x128xi32>
    %86 = arith.cmpi slt, %30, %85 : vector<32x128xi32>
    %cst_44 = arith.constant 0.000000e+00 : f32
    %87 = vector.broadcast %cst_44 : f32 to vector<32x128xf32>
    %88 = arith.select %86, %69, %87 : vector<32x128xi1>, vector<32x128xf32>
    %c125_i32 = arith.constant 125 : i32
    %89 = vector.broadcast %c125_i32 : i32 to vector<32x128xi32>
    %90 = arith.cmpi eq, %30, %89 : vector<32x128xi32>
    %91 = vector.shape_cast %78 : vector<32x1xf32> to vector<32x1xf32>
    %92 = vector.broadcast %91 : vector<32x1xf32> to vector<32x128xf32>
    %93 = arith.select %90, %92, %88 : vector<32x128xi1>, vector<32x128xf32>
    %c126_i32 = arith.constant 126 : i32
    %94 = vector.broadcast %c126_i32 : i32 to vector<32x128xi32>
    %95 = arith.cmpi eq, %30, %94 : vector<32x128xi32>
    %96 = vector.shape_cast %84 : vector<32x1xf32> to vector<32x1xf32>
    %97 = vector.broadcast %96 : vector<32x1xf32> to vector<32x128xf32>
    %98 = arith.select %95, %97, %93 : vector<32x128xi1>, vector<32x128xf32>
    %c127_i32_45 = arith.constant 127 : i32
    %99 = vector.broadcast %c127_i32_45 : i32 to vector<32x128xi32>
    %100 = arith.cmpi eq, %30, %99 : vector<32x128xi32>
    %101 = vector.shape_cast %71 : vector<32x1xf32> to vector<32x1xf32>
    %102 = vector.broadcast %101 : vector<32x1xf32> to vector<32x128xf32>
    %103 = arith.select %100, %102, %98 : vector<32x128xi1>, vector<32x128xf32>
    %c0_46 = arith.constant 0 : index
    %c0_47 = arith.constant 0 : index
    %104 = vector.load %arg12[%c0_46, %c0_47] : memref<32x128xf32, #tpu.memory_space<vmem>>, vector<32x128xf32>
    tpu.vector_store %arg12[%c0_46, %c0_47], %103 {strides = array<i32>} : memref<32x128xf32, #tpu.memory_space<vmem>>, vector<32x128xf32>,
    return
  }
}

</mosaic_0001>

<llo_original>
// kernel: tpu_custom_call.1
$region0: #{tpu_custom_call.1}
  #allocation0 [shape = 'u32[]', space=smem, size = 0x4, offset = 0x4, fixed_abs, tag = 'smem constant byte address 0x4 - core index']
  #allocation1 [shape = 'u32[144,128]{1,0:T(1,128)}', space=vmem, size = 0x12000, scoped, tag = 'internal scratch']
  %s0 = inlined_call_operand.hbm [shape: bf16[32,128], index: 0, kind: input, shape index: {}]
  %s1 = inlined_call_operand.hbm [shape: bf16[128,128], index: 1, kind: input, shape index: {}]
  %s2 = inlined_call_operand.hbm [shape: f32[1,128], index: 2, kind: input, shape index: {}]
  %s3 = inlined_call_operand.hbm [shape: bf16[128,128], index: 3, kind: input, shape index: {}]
  %s4 = inlined_call_operand.hbm [shape: f32[1,128], index: 4, kind: input, shape index: {}]
  %s5 = inlined_call_operand.hbm [shape: bf16[128,128], index: 5, kind: input, shape index: {}]
  %s6 = inlined_call_operand.hbm [shape: f32[1,128], index: 6, kind: input, shape index: {}]
  %s7 = inlined_call_operand.hbm [shape: bf16[128,128], index: 7, kind: input, shape index: {}]
  %s8 = inlined_call_operand.hbm [shape: f32[1,128], index: 8, kind: input, shape index: {}]
  %s9 = inlined_call_operand.hbm [shape: bf16[32,128], index: 9, kind: input, shape index: {}]
  %s10 = inlined_call_operand.hbm [shape: s32[32,1], index: 10, kind: input, shape index: {}]
  %s11 = inlined_call_operand.hbm [shape: f32[32,128], index: 11, kind: output, shape index: {0}]
  %s12 = inlined_call_operand.hbm [shape: f32[32,128], index: 12, kind: output, shape index: {1}]
  %13 = xla_tuple %s11, %s12
  %s14 = sld [smem:[#allocation0]]
  $region106: #{tpu_custom_call.1} parent=0
    _
  %s16 = ssub.s32 1, %s14
  %s17 = scalar_select 0, %s16, %s14
  $region1: #{tpu_custom_call.1} parent=0
    #allocation2 [shape = 'u8[8192]{0}', space=vmem, size = 0x2000, scoped, tag = 'input window, operand 0, single buffered']
    #allocation3 [shape = 's32[1]{0}', space=sflag, size = 0x4, scoped, tag = 'scoped memory for tpu_custom_call.1']
    #allocation4 [shape = 's32[1]{0}', space=sflag, size = 0x4, scoped, tag = 'scoped memory for tpu_custom_call.1']
    #allocation5 [shape = 'u8[32768]{0}', space=vmem, size = 0x8000, scoped, tag = 'input window, operand 1, single buffered']
    #allocation6 [shape = 's32[1]{0}', space=sflag, size = 0x4, scoped, tag = 'scoped memory for tpu_custom_call.1']
    #allocation7 [shape = 'u8[512]{0}', space=vmem, size = 0x400, scoped, tag = 'input window, operand 2, single buffered']
    #allocation8 [shape = 'u8[32768]{0}', space=vmem, size = 0x8000, scoped, tag = 'input window, operand 3, single buffered']
    #allocation9 [shape = 's32[1]{0}', space=sflag, size = 0x4, scoped, tag = 'scoped memory for tpu_custom_call.1']
    #allocation10 [shape = 'u8[512]{0}', space=vmem, size = 0x400, scoped, tag = 'input window, operand 4, single buffered']
    #allocation11 [shape = 'u8[32768]{0}', space=vmem, size = 0x8000, scoped, tag = 'input window, operand 5, single buffered']
    #allocation12 [shape = 's32[1]{0}', space=sflag, size = 0x4, scoped, tag = 'scoped memory for tpu_custom_call.1']
    #allocation13 [shape = 'u8[512]{0}', space=vmem, size = 0x400, scoped, tag = 'input window, operand 6, single buffered']
    #allocation14 [shape = 'u8[32768]{0}', space=vmem, size = 0x8000, scoped, tag = 'input window, operand 7, single buffered']
    #allocation15 [shape = 's32[1]{0}', space=sflag, size = 0x4, scoped, tag = 'scoped memory for tpu_custom_call.1']
    #allocation16 [shape = 'u8[512]{0}', space=vmem, size = 0x400, scoped, tag = 'input window, operand 8, single buffered']
    #allocation17 [shape = 'u8[8192]{0}', space=vmem, size = 0x2000, scoped, tag = 'input window, operand 9, single buffered']
    #allocation18 [shape = 's32[1]{0}', space=sflag, size = 0x4, scoped, tag = 'scoped memory for tpu_custom_call.1']
    #allocation19 [shape = 'u8[16384]{0}', space=vmem, size = 0x4000, scoped, tag = 'input window, operand 10, single buffered']
    #allocation20 [shape = 'u8[16384]{0}', space=vmem, size = 0x4000, scoped, tag = 'output window, operand 0, single buffered']
    #allocation21 [shape = 'u8[16384]{0}', space=vmem, size = 0x4000, scoped, tag = 'output window, operand 1, single buffered']
    #allocation22 [shape = 's32[1]{0}', space=sflag, size = 0x4, scoped, tag = 'scoped memory for tpu_custom_call.1']
    %18 = vsyncpa [#allocation3], 0
    %19 = vsyncpa [#allocation6], 0
    %20 = vsyncpa [#allocation9], 0
    %21 = vsyncpa [#allocation12], 0
    %22 = vsyncpa [#allocation15], 0
    %23 = vsyncpa [#allocation18], 0
    %24 = vsyncpa [#allocation4], 0
    %25 = vsyncpa [#allocation22], 0
    // Predicated region
    $region2: #{tpu_custom_call.1} parent=1 // pred_check
      _
    $region3: #{tpu_custom_call.1} parent=1 // pred_check_branch
      %27 = sbr.rel (0) target = $region5
    $region4: #{tpu_custom_call.1} parent=1 // pred_region
      %s29 = ssub.s32 256, 256
      %30 = vsyncadd [#allocation3], %s29
      %s31 = sshll.u32 [#allocation2], 4
      %s32 = int_to_ptr.vmem [resolvable:$true] %s31
      %37 = dma.hbm_to_vmem [thread:$0]  %s0, 256, %s32, [#allocation3], 64, 64, 4
    $region5: #{tpu_custom_call.1} parent=1 // pred_fallthru
      _
    // Predicated region
    $region6: #{tpu_custom_call.1} parent=1 // pred_check
      _
    $region7: #{tpu_custom_call.1} parent=1 // pred_check_branch
      %39 = sbr.rel (0) target = $region9
    $region8: #{tpu_custom_call.1} parent=1 // pred_region
      %s41 = ssub.s32 1024, 1024
      %42 = vsyncadd [#allocation6], %s41
      %s43 = sshll.u32 [#allocation5], 4
      %s44 = int_to_ptr.vmem [resolvable:$true] %s43
      %49 = dma.hbm_to_vmem [thread:$0]  %s1, 1024, %s44, [#allocation6], 64, 64, 4
    $region9: #{tpu_custom_call.1} parent=1 // pred_fallthru
      _
    // Predicated region
    $region10: #{tpu_custom_call.1} parent=1 // pred_check
      _
    $region11: #{tpu_custom_call.1} parent=1 // pred_check_branch
      %51 = sbr.rel (0) target = $region13
    $region12: #{tpu_custom_call.1} parent=1 // pred_region
      %s53 = ssub.s32 16, 16
      %54 = vsyncadd [#allocation6], %s53
      %s56 = sshll.u32 [#allocation7], 4
      %s57 = int_to_ptr.vmem [resolvable:$true] %s56
      %59 = dma.hbm_to_vmem [thread:$0]  %s2, 16, %s57, [#allocation6]
    $region13: #{tpu_custom_call.1} parent=1 // pred_fallthru
      _
    // Predicated region
    $region14: #{tpu_custom_call.1} parent=1 // pred_check
      _
    $region15: #{tpu_custom_call.1} parent=1 // pred_check_branch
      %61 = sbr.rel (0) target = $region17
    $region16: #{tpu_custom_call.1} parent=1 // pred_region
      %s63 = ssub.s32 1024, 1024
      %64 = vsyncadd [#allocation9], %s63
      %s65 = sshll.u32 [#allocation8], 4
      %s66 = int_to_ptr.vmem [resolvable:$true] %s65
      %71 = dma.hbm_to_vmem [thread:$0]  %s3, 1024, %s66, [#allocation9], 64, 64, 4
    $region17: #{tpu_custom_call.1} parent=1 // pred_fallthru
      _
    // Predicated region
    $region18: #{tpu_custom_call.1} parent=1 // pred_check
      _
    $region19: #{tpu_custom_call.1} parent=1 // pred_check_branch
      %73 = sbr.rel (0) target = $region21
    $region20: #{tpu_custom_call.1} parent=1 // pred_region
      %s75 = ssub.s32 16, 16
      %76 = vsyncadd [#allocation9], %s75
      %s78 = sshll.u32 [#allocation10], 4
      %s79 = int_to_ptr.vmem [resolvable:$true] %s78
      %81 = dma.hbm_to_vmem [thread:$0]  %s4, 16, %s79, [#allocation9]
    $region21: #{tpu_custom_call.1} parent=1 // pred_fallthru
      _
    // Predicated region
    $region22: #{tpu_custom_call.1} parent=1 // pred_check
      _
    $region23: #{tpu_custom_call.1} parent=1 // pred_check_branch
      %83 = sbr.rel (0) target = $region25
    $region24: #{tpu_custom_call.1} parent=1 // pred_region
      %s85 = ssub.s32 1024, 1024
      %86 = vsyncadd [#allocation12], %s85
      %s87 = sshll.u32 [#allocation11], 4
      %s88 = int_to_ptr.vmem [resolvable:$true] %s87
      %93 = dma.hbm_to_vmem [thread:$0]  %s5, 1024, %s88, [#allocation12], 64, 64, 4
    $region25: #{tpu_custom_call.1} parent=1 // pred_fallthru
      _
    // Predicated region
    $region26: #{tpu_custom_call.1} parent=1 // pred_check
      _
    $region27: #{tpu_custom_call.1} parent=1 // pred_check_branch
      %95 = sbr.rel (0) target = $region29
    $region28: #{tpu_custom_call.1} parent=1 // pred_region
      %s97 = ssub.s32 16, 16
      %98 = vsyncadd [#allocation12], %s97
      %s100 = sshll.u32 [#allocation13], 4
      %s101 = int_to_ptr.vmem [resolvable:$true] %s100
      %103 = dma.hbm_to_vmem [thread:$0]  %s6, 16, %s101, [#allocation12]
    $region29: #{tpu_custom_call.1} parent=1 // pred_fallthru
      _
    // Predicated region
    $region30: #{tpu_custom_call.1} parent=1 // pred_check
      _
    $region31: #{tpu_custom_call.1} parent=1 // pred_check_branch
      %105 = sbr.rel (0) target = $region33
    $region32: #{tpu_custom_call.1} parent=1 // pred_region
      %s107 = ssub.s32 1024, 1024
      %108 = vsyncadd [#allocation15], %s107
      %s109 = sshll.u32 [#allocation14], 4
      %s110 = int_to_ptr.vmem [resolvable:$true] %s109
      %115 = dma.hbm_to_vmem [thread:$0]  %s7, 1024, %s110, [#allocation15], 64, 64, 4
    $region33: #{tpu_custom_call.1} parent=1 // pred_fallthru
      _
    // Predicated region
    $region34: #{tpu_custom_call.1} parent=1 // pred_check
      _
    $region35: #{tpu_custom_call.1} parent=1 // pred_check_branch
      %117 = sbr.rel (0) target = $region37
    $region36: #{tpu_custom_call.1} parent=1 // pred_region
      %s119 = ssub.s32 16, 16
      %120 = vsyncadd [#allocation15], %s119
      %s122 = sshll.u32 [#allocation16], 4
      %s123 = int_to_ptr.vmem [resolvable:$true] %s122
      %125 = dma.hbm_to_vmem [thread:$0]  %s8, 16, %s123, [#allocation15]
    $region37: #{tpu_custom_call.1} parent=1 // pred_fallthru
      _
    // Predicated region
    $region38: #{tpu_custom_call.1} parent=1 // pred_check
      _
    $region39: #{tpu_custom_call.1} parent=1 // pred_check_branch
      %127 = sbr.rel (0) target = $region41
    $region40: #{tpu_custom_call.1} parent=1 // pred_region
      %s129 = ssub.s32 256, 256
      %130 = vsyncadd [#allocation18], %s129
      %s131 = sshll.u32 [#allocation17], 4
      %s132 = int_to_ptr.vmem [resolvable:$true] %s131
      %137 = dma.hbm_to_vmem [thread:$0]  %s9, 256, %s132, [#allocation18], 64, 64, 4
    $region41: #{tpu_custom_call.1} parent=1 // pred_fallthru
      _
    // Predicated region
    $region42: #{tpu_custom_call.1} parent=1 // pred_check
      _
    $region43: #{tpu_custom_call.1} parent=1 // pred_check_branch
      %139 = sbr.rel (0) target = $region45
    $region44: #{tpu_custom_call.1} parent=1 // pred_region
      %s141 = ssub.s32 512, 512
      %142 = vsyncadd [#allocation18], %s141
      %s143 = sshll.u32 [#allocation19], 4
      %s144 = int_to_ptr.vmem [resolvable:$true] %s143
      %149 = dma.hbm_to_vmem [thread:$0]  %s10, 512, %s144, [#allocation18], 128, 128, 8
    $region45: #{tpu_custom_call.1} parent=1 // pred_fallthru
      _
    // Predicated region
    $region46: #{tpu_custom_call.1} parent=1 // pred_check
      _
    $region47: #{tpu_custom_call.1} parent=1 // pred_check_branch
      %151 = sbr.rel (0) target = $region49
    $region48: #{tpu_custom_call.1} parent=1 // pred_region
      %152 = dma.done [#allocation3], 256
    $region49: #{tpu_custom_call.1} parent=1 // pred_fallthru
      _
    // Predicated region
    $region50: #{tpu_custom_call.1} parent=1 // pred_check
      _
    $region51: #{tpu_custom_call.1} parent=1 // pred_check_branch
      %154 = sbr.rel (0) target = $region53
    $region52: #{tpu_custom_call.1} parent=1 // pred_region
      %155 = dma.done [#allocation6], 1024
    $region53: #{tpu_custom_call.1} parent=1 // pred_fallthru
      _
    // Predicated region
    $region54: #{tpu_custom_call.1} parent=1 // pred_check
      _
    $region55: #{tpu_custom_call.1} parent=1 // pred_check_branch
      %157 = sbr.rel (0) target = $region57
    $region56: #{tpu_custom_call.1} parent=1 // pred_region
      %158 = dma.done [#allocation6], 16
    $region57: #{tpu_custom_call.1} parent=1 // pred_fallthru
      _
    // Predicated region
    $region58: #{tpu_custom_call.1} parent=1 // pred_check
      _
    $region59: #{tpu_custom_call.1} parent=1 // pred_check_branch
      %160 = sbr.rel (0) target = $region61
    $region60: #{tpu_custom_call.1} parent=1 // pred_region
      %161 = dma.done [#allocation9], 1024
    $region61: #{tpu_custom_call.1} parent=1 // pred_fallthru
      _
    // Predicated region
    $region62: #{tpu_custom_call.1} parent=1 // pred_check
      _
    $region63: #{tpu_custom_call.1} parent=1 // pred_check_branch
      %163 = sbr.rel (0) target = $region65
    $region64: #{tpu_custom_call.1} parent=1 // pred_region
      %164 = dma.done [#allocation9], 16
    $region65: #{tpu_custom_call.1} parent=1 // pred_fallthru
      _
    // Predicated region
    $region66: #{tpu_custom_call.1} parent=1 // pred_check
      _
    $region67: #{tpu_custom_call.1} parent=1 // pred_check_branch
      %166 = sbr.rel (0) target = $region69
    $region68: #{tpu_custom_call.1} parent=1 // pred_region
      %167 = dma.done [#allocation12], 1024
    $region69: #{tpu_custom_call.1} parent=1 // pred_fallthru
      _
    // Predicated region
    $region70: #{tpu_custom_call.1} parent=1 // pred_check
      _
    $region71: #{tpu_custom_call.1} parent=1 // pred_check_branch
      %169 = sbr.rel (0) target = $region73
    $region72: #{tpu_custom_call.1} parent=1 // pred_region
      %170 = dma.done [#allocation12], 16
    $region73: #{tpu_custom_call.1} parent=1 // pred_fallthru
      _
    // Predicated region
    $region74: #{tpu_custom_call.1} parent=1 // pred_check
      _
    $region75: #{tpu_custom_call.1} parent=1 // pred_check_branch
      %172 = sbr.rel (0) target = $region77
    $region76: #{tpu_custom_call.1} parent=1 // pred_region
      %173 = dma.done [#allocation15], 1024
    $region77: #{tpu_custom_call.1} parent=1 // pred_fallthru
      _
    // Predicated region
    $region78: #{tpu_custom_call.1} parent=1 // pred_check
      _
    $region79: #{tpu_custom_call.1} parent=1 // pred_check_branch
      %175 = sbr.rel (0) target = $region81
    $region80: #{tpu_custom_call.1} parent=1 // pred_region
      %176 = dma.done [#allocation15], 16
    $region81: #{tpu_custom_call.1} parent=1 // pred_fallthru
      _
    // Predicated region
    $region82: #{tpu_custom_call.1} parent=1 // pred_check
      _
    $region83: #{tpu_custom_call.1} parent=1 // pred_check_branch
      %178 = sbr.rel (0) target = $region85
    $region84: #{tpu_custom_call.1} parent=1 // pred_region
      %179 = dma.done [#allocation18], 256
    $region85: #{tpu_custom_call.1} parent=1 // pred_fallthru
      _
    // Predicated region
    $region86: #{tpu_custom_call.1} parent=1 // pred_check
      _
    $region87: #{tpu_custom_call.1} parent=1 // pred_check_branch
      %181 = sbr.rel (0) target = $region89
    $region88: #{tpu_custom_call.1} parent=1 // pred_region
      %182 = dma.done [#allocation18], 512
    $region89: #{tpu_custom_call.1} parent=1 // pred_fallthru
      _
    %v184 = vld [vmem:[#allocation2] sm:$0xf]
    %v185 = vld [vmem:[#allocation2 + $0x4] sm:$0xf]
    %v186 = vld [vmem:[#allocation2 + $0x8] sm:$0xf]
    %v187 = vld [vmem:[#allocation2 + $0xc] sm:$0xf]
    %v188 = vld [vmem:[#allocation5] sm:$0xf]
    %v189 = vld [vmem:[#allocation5 + $0x4] sm:$0xf]
    %v190 = vld [vmem:[#allocation5 + $0x8] sm:$0xf]
    %v191 = vld [vmem:[#allocation5 + $0xc] sm:$0xf]
    %v192 = vld [vmem:[#allocation5 + $0x10] sm:$0xf]
    %v193 = vld [vmem:[#allocation5 + $0x14] sm:$0xf]
    %v194 = vld [vmem:[#allocation5 + $0x18] sm:$0xf]
    %v195 = vld [vmem:[#allocation5 + $0x1c] sm:$0xf]
    %v196 = vld [vmem:[#allocation5 + $0x20] sm:$0xf]
    %v197 = vld [vmem:[#allocation5 + $0x24] sm:$0xf]
    %v198 = vld [vmem:[#allocation5 + $0x28] sm:$0xf]
    %v199 = vld [vmem:[#allocation5 + $0x2c] sm:$0xf]
    %v200 = vld [vmem:[#allocation5 + $0x30] sm:$0xf]
    %v201 = vld [vmem:[#allocation5 + $0x34] sm:$0xf]
    %v202 = vld [vmem:[#allocation5 + $0x38] sm:$0xf]
    %v203 = vld [vmem:[#allocation5 + $0x3c] sm:$0xf]
    %v204 = vld [vmem:[#allocation7] sm:$0x1]
    %v206 = vlaneseq
    %v207 = vshrl.u32 %v206, 7
    %v208 = vsub.s32 0, %v207
    %v209 = vrot.slane %v204, %v208
    %v215 = vunpack.c.l.b16 %v184
    %v216 = vunpack.c.l.b16 %v185
    %v217 = vunpack.c.l.b16 %v186
    %v218 = vunpack.c.l.b16 %v187
    %v219 = vpack.c.b16 %v216, %v215
    %v220 = vpack.c.b16 %v218, %v217
    %v239 = vunpack.c.l.b16 %v188
    %v240 = vunpack.c.l.b16 %v189
    %v241 = vunpack.c.l.b16 %v190
    %v242 = vunpack.c.l.b16 %v191
    %v243 = vunpack.c.l.b16 %v192
    %v244 = vunpack.c.l.b16 %v193
    %v245 = vunpack.c.l.b16 %v194
    %v246 = vunpack.c.l.b16 %v195
    %v247 = vunpack.c.l.b16 %v196
    %v248 = vunpack.c.l.b16 %v197
    %v249 = vunpack.c.l.b16 %v198
    %v250 = vunpack.c.l.b16 %v199
    %v251 = vunpack.c.l.b16 %v200
    %v252 = vunpack.c.l.b16 %v201
    %v253 = vunpack.c.l.b16 %v202
    %v254 = vunpack.c.l.b16 %v203
    %v255 = vpack.c.b16 %v240, %v239
    %v256 = vpack.c.b16 %v242, %v241
    %v257 = vpack.c.b16 %v244, %v243
    %v258 = vpack.c.b16 %v246, %v245
    %v259 = vpack.c.b16 %v248, %v247
    %v260 = vpack.c.b16 %v250, %v249
    %v261 = vpack.c.b16 %v252, %v251
    %v262 = vpack.c.b16 %v254, %v253
    %271 = vmatprep.subr.bf16.mxu0 0
    %272 = vmatpush1.bf16.msra.mxu0 %v255
    %273 = vmatprep.subr.bf16.mxu0 0
    %274 = vmatpush1.bf16.msra.mxu0 %v256
    %275 = vmatprep.subr.bf16.mxu0 0
    %276 = vmatpush1.bf16.msra.mxu0 %v257
    %277 = vmatprep.subr.bf16.mxu0 0
    %278 = vmatpush1.bf16.msra.mxu0 %v258
    %279 = vmatprep.subr.bf16.mxu0 0
    %280 = vmatpush1.bf16.msra.mxu0 %v259
    %281 = vmatprep.subr.bf16.mxu0 0
    %282 = vmatpush1.bf16.msra.mxu0 %v260
    %283 = vmatprep.subr.bf16.mxu0 0
    %284 = vmatpush1.bf16.msra.mxu0 %v261
    %285 = vmatprep.subr.bf16.mxu0 0
    %286 = vmatpush1.bf16.msra.mxu0 %v262
    %287 = vmatprep.subr.bf16.mxu0 0
    %288 = vmatpush1.bf16.msra.mxu0 0
    %289 = vmatprep.subr.bf16.mxu0 0
    %290 = vmatpush1.bf16.msra.mxu0 0
    %291 = vmatprep.subr.bf16.mxu0 0
    %292 = vmatpush1.bf16.msra.mxu0 0
    %293 = vmatprep.subr.bf16.mxu0 0
    %294 = vmatpush1.bf16.msra.mxu0 0
    %295 = vmatprep.subr.bf16.mxu0 0
    %296 = vmatpush1.bf16.msra.mxu0 0
    %297 = vmatprep.subr.bf16.mxu0 0
    %298 = vmatpush1.bf16.msra.mxu0 0
    %299 = vmatprep.subr.bf16.mxu0 0
    %300 = vmatpush1.bf16.msra.mxu0 0
    %301 = vmatprep.subr.bf16.mxu0 0
    %302 = vmatpush1.bf16.msra.mxu0 0
    %303 = vmatprep.mubr.bf16.mxu0 0
    %304 = vmatmul.mubr.bf16.gmra.mrb[0].mxu0 %v219
    %v305 = vpop.f32.mrb[0].mxu0
    %v306 = vadd.f32 %v209, %v305
    %v307 = vpop.f32.mrb[0].mxu0
    %v308 = vpop.f32.mrb[0].mxu0
    %v309 = vadd.f32 %v209, %v308
    %v310 = vpop.f32.mrb[0].mxu0
    %311 = vmatprep.mubr.bf16.mxu0 0
    %312 = vmatmul.mubr.bf16.gmra.mrb[0].mxu0 %v220
    %v313 = vpop.f32.mrb[0].mxu0
    %v314 = vadd.f32 %v209, %v313
    %v315 = vpop.f32.mrb[0].mxu0
    %v316 = vpop.f32.mrb[0].mxu0
    %v317 = vadd.f32 %v209, %v316
    %v318 = vpop.f32.mrb[0].mxu0
    %319 = vdwg.mxu0
    %v320 = vmax.f32 %v306, 0.0
    %v321 = vmax.f32 %v309, 0.0
    %v322 = vmax.f32 %v314, 0.0
    %v323 = vmax.f32 %v317, 0.0
    %v324 = vld [vmem:[#allocation8] sm:$0xf]
    %v325 = vld [vmem:[#allocation8 + $0x4] sm:$0xf]
    %v326 = vld [vmem:[#allocation8 + $0x8] sm:$0xf]
    %v327 = vld [vmem:[#allocation8 + $0xc] sm:$0xf]
    %v328 = vld [vmem:[#allocation8 + $0x10] sm:$0xf]
    %v329 = vld [vmem:[#allocation8 + $0x14] sm:$0xf]
    %v330 = vld [vmem:[#allocation8 + $0x18] sm:$0xf]
    %v331 = vld [vmem:[#allocation8 + $0x1c] sm:$0xf]
    %v332 = vld [vmem:[#allocation8 + $0x20] sm:$0xf]
    %v333 = vld [vmem:[#allocation8 + $0x24] sm:$0xf]
    %v334 = vld [vmem:[#allocation8 + $0x28] sm:$0xf]
    %v335 = vld [vmem:[#allocation8 + $0x2c] sm:$0xf]
    %v336 = vld [vmem:[#allocation8 + $0x30] sm:$0xf]
    %v337 = vld [vmem:[#allocation8 + $0x34] sm:$0xf]
    %v338 = vld [vmem:[#allocation8 + $0x38] sm:$0xf]
    %v339 = vld [vmem:[#allocation8 + $0x3c] sm:$0xf]
    %v340 = vld [vmem:[#allocation10] sm:$0x1]
    %v341 = vpack.c.bf16 %v321, %v320
    %v342 = vpack.c.bf16 %v323, %v322
    %v344 = vlaneseq
    %v345 = vshrl.u32 %v344, 7
    %v346 = vsub.s32 0, %v345
    %v347 = vrot.slane %v340, %v346
    %v365 = vunpack.c.l.b16 %v324
    %v366 = vunpack.c.l.b16 %v325
    %v367 = vunpack.c.l.b16 %v326
    %v368 = vunpack.c.l.b16 %v327
    %v369 = vunpack.c.l.b16 %v328
    %v370 = vunpack.c.l.b16 %v329
    %v371 = vunpack.c.l.b16 %v330
    %v372 = vunpack.c.l.b16 %v331
    %v373 = vunpack.c.l.b16 %v332
    %v374 = vunpack.c.l.b16 %v333
    %v375 = vunpack.c.l.b16 %v334
    %v376 = vunpack.c.l.b16 %v335
    %v377 = vunpack.c.l.b16 %v336
    %v378 = vunpack.c.l.b16 %v337
    %v379 = vunpack.c.l.b16 %v338
    %v380 = vunpack.c.l.b16 %v339
    %v381 = vpack.c.b16 %v366, %v365
    %v382 = vpack.c.b16 %v368, %v367
    %v383 = vpack.c.b16 %v370, %v369
    %v384 = vpack.c.b16 %v372, %v371
    %v385 = vpack.c.b16 %v374, %v373
    %v386 = vpack.c.b16 %v376, %v375
    %v387 = vpack.c.b16 %v378, %v377
    %v388 = vpack.c.b16 %v380, %v379
    %397 = vmatprep.subr.bf16.mxu0 0
    %398 = vmatpush1.bf16.msra.mxu0 %v381
    %399 = vmatprep.subr.bf16.mxu0 0
    %400 = vmatpush1.bf16.msra.mxu0 %v382
    %401 = vmatprep.subr.bf16.mxu0 0
    %402 = vmatpush1.bf16.msra.mxu0 %v383
    %403 = vmatprep.subr.bf16.mxu0 0
    %404 = vmatpush1.bf16.msra.mxu0 %v384
    %405 = vmatprep.subr.bf16.mxu0 0
    %406 = vmatpush1.bf16.msra.mxu0 %v385
    %407 = vmatprep.subr.bf16.mxu0 0
    %408 = vmatpush1.bf16.msra.mxu0 %v386
    %409 = vmatprep.subr.bf16.mxu0 0
    %410 = vmatpush1.bf16.msra.mxu0 %v387
    %411 = vmatprep.subr.bf16.mxu0 0
    %412 = vmatpush1.bf16.msra.mxu0 %v388
    %413 = vmatprep.subr.bf16.mxu0 0
    %414 = vmatpush1.bf16.msra.mxu0 0
    %415 = vmatprep.subr.bf16.mxu0 0
    %416 = vmatpush1.bf16.msra.mxu0 0
    %417 = vmatprep.subr.bf16.mxu0 0
    %418 = vmatpush1.bf16.msra.mxu0 0
    %419 = vmatprep.subr.bf16.mxu0 0
    %420 = vmatpush1.bf16.msra.mxu0 0
    %421 = vmatprep.subr.bf16.mxu0 0
    %422 = vmatpush1.bf16.msra.mxu0 0
    %423 = vmatprep.subr.bf16.mxu0 0
    %424 = vmatpush1.bf16.msra.mxu0 0
    %425 = vmatprep.subr.bf16.mxu0 0
    %426 = vmatpush1.bf16.msra.mxu0 0
    %427 = vmatprep.subr.bf16.mxu0 0
    %428 = vmatpush1.bf16.msra.mxu0 0
    %429 = vmatprep.mubr.bf16.mxu0 0
    %430 = vmatmul.mubr.bf16.gmra.mrb[0].mxu0 %v341
    %v431 = vpop.f32.mrb[0].mxu0
    %v432 = vadd.f32 %v347, %v431
    %v433 = vpop.f32.mrb[0].mxu0
    %v434 = vpop.f32.mrb[0].mxu0
    %v435 = vadd.f32 %v347, %v434
    %v436 = vpop.f32.mrb[0].mxu0
    %437 = vmatprep.mubr.bf16.mxu0 0
    %438 = vmatmul.mubr.bf16.gmra.mrb[0].mxu0 %v342
    %v439 = vpop.f32.mrb[0].mxu0
    %v440 = vadd.f32 %v347, %v439
    %v441 = vpop.f32.mrb[0].mxu0
    %v442 = vpop.f32.mrb[0].mxu0
    %v443 = vadd.f32 %v347, %v442
    %v444 = vpop.f32.mrb[0].mxu0
    %445 = vdwg.mxu0
    %v446 = vmax.f32 %v432, 0.0
    %v447 = vmax.f32 %v435, 0.0
    %v448 = vmax.f32 %v440, 0.0
    %v449 = vmax.f32 %v443, 0.0
    %v450 = vld [vmem:[#allocation11] sm:$0xf]
    %v451 = vld [vmem:[#allocation11 + $0x4] sm:$0xf]
    %v452 = vld [vmem:[#allocation11 + $0x8] sm:$0xf]
    %v453 = vld [vmem:[#allocation11 + $0xc] sm:$0xf]
    %v454 = vld [vmem:[#allocation11 + $0x10] sm:$0xf]
    %v455 = vld [vmem:[#allocation11 + $0x14] sm:$0xf]
    %v456 = vld [vmem:[#allocation11 + $0x18] sm:$0xf]
    %v457 = vld [vmem:[#allocation11 + $0x1c] sm:$0xf]
    %v458 = vld [vmem:[#allocation11 + $0x20] sm:$0xf]
    %v459 = vld [vmem:[#allocation11 + $0x24] sm:$0xf]
    %v460 = vld [vmem:[#allocation11 + $0x28] sm:$0xf]
    %v461 = vld [vmem:[#allocation11 + $0x2c] sm:$0xf]
    %v462 = vld [vmem:[#allocation11 + $0x30] sm:$0xf]
    %v463 = vld [vmem:[#allocation11 + $0x34] sm:$0xf]
    %v464 = vld [vmem:[#allocation11 + $0x38] sm:$0xf]
    %v465 = vld [vmem:[#allocation11 + $0x3c] sm:$0xf]
    %v466 = vld [vmem:[#allocation13] sm:$0x1]
    %v467 = vpack.c.bf16 %v447, %v446
    %v468 = vpack.c.bf16 %v449, %v448
    %v470 = vlaneseq
    %v471 = vshrl.u32 %v470, 7
    %v472 = vsub.s32 0, %v471
    %v473 = vrot.slane %v466, %v472
    %v491 = vunpack.c.l.b16 %v450
    %v492 = vunpack.c.l.b16 %v451
    %v493 = vunpack.c.l.b16 %v452
    %v494 = vunpack.c.l.b16 %v453
    %v495 = vunpack.c.l.b16 %v454
    %v496 = vunpack.c.l.b16 %v455
    %v497 = vunpack.c.l.b16 %v456
    %v498 = vunpack.c.l.b16 %v457
    %v499 = vunpack.c.l.b16 %v458
    %v500 = vunpack.c.l.b16 %v459
    %v501 = vunpack.c.l.b16 %v460
    %v502 = vunpack.c.l.b16 %v461
    %v503 = vunpack.c.l.b16 %v462
    %v504 = vunpack.c.l.b16 %v463
    %v505 = vunpack.c.l.b16 %v464
    %v506 = vunpack.c.l.b16 %v465
    %v507 = vpack.c.b16 %v492, %v491
    %v508 = vpack.c.b16 %v494, %v493
    %v509 = vpack.c.b16 %v496, %v495
    %v510 = vpack.c.b16 %v498, %v497
    %v511 = vpack.c.b16 %v500, %v499
    %v512 = vpack.c.b16 %v502, %v501
    %v513 = vpack.c.b16 %v504, %v503
    %v514 = vpack.c.b16 %v506, %v505
    %523 = vmatprep.subr.bf16.mxu0 0
    %524 = vmatpush1.bf16.msra.mxu0 %v507
    %525 = vmatprep.subr.bf16.mxu0 0
    %526 = vmatpush1.bf16.msra.mxu0 %v508
    %527 = vmatprep.subr.bf16.mxu0 0
    %528 = vmatpush1.bf16.msra.mxu0 %v509
    %529 = vmatprep.subr.bf16.mxu0 0
    %530 = vmatpush1.bf16.msra.mxu0 %v510
    %531 = vmatprep.subr.bf16.mxu0 0
    %532 = vmatpush1.bf16.msra.mxu0 %v511
    %533 = vmatprep.subr.bf16.mxu0 0
    %534 = vmatpush1.bf16.msra.mxu0 %v512
    %535 = vmatprep.subr.bf16.mxu0 0
    %536 = vmatpush1.bf16.msra.mxu0 %v513
    %537 = vmatprep.subr.bf16.mxu0 0
    %538 = vmatpush1.bf16.msra.mxu0 %v514
    %539 = vmatprep.subr.bf16.mxu0 0
    %540 = vmatpush1.bf16.msra.mxu0 0
    %541 = vmatprep.subr.bf16.mxu0 0
    %542 = vmatpush1.bf16.msra.mxu0 0
    %543 = vmatprep.subr.bf16.mxu0 0
    %544 = vmatpush1.bf16.msra.mxu0 0
    %545 = vmatprep.subr.bf16.mxu0 0
    %546 = vmatpush1.bf16.msra.mxu0 0
    %547 = vmatprep.subr.bf16.mxu0 0
    %548 = vmatpush1.bf16.msra.mxu0 0
    %549 = vmatprep.subr.bf16.mxu0 0
    %550 = vmatpush1.bf16.msra.mxu0 0
    %551 = vmatprep.subr.bf16.mxu0 0
    %552 = vmatpush1.bf16.msra.mxu0 0
    %553 = vmatprep.subr.bf16.mxu0 0
    %554 = vmatpush1.bf16.msra.mxu0 0
    %555 = vmatprep.mubr.bf16.mxu0 0
    %556 = vmatmul.mubr.bf16.gmra.mrb[0].mxu0 %v467
    %v557 = vpop.f32.mrb[0].mxu0
    %v558 = vadd.f32 %v473, %v557
    %v559 = vpop.f32.mrb[0].mxu0
    %v560 = vpop.f32.mrb[0].mxu0
    %v561 = vadd.f32 %v473, %v560
    %v562 = vpop.f32.mrb[0].mxu0
    %563 = vmatprep.mubr.bf16.mxu0 0
    %564 = vmatmul.mubr.bf16.gmra.mrb[0].mxu0 %v468
    %v565 = vpop.f32.mrb[0].mxu0
    %v566 = vadd.f32 %v473, %v565
    %v567 = vpop.f32.mrb[0].mxu0
    %v568 = vpop.f32.mrb[0].mxu0
    %v569 = vadd.f32 %v473, %v568
    %v570 = vpop.f32.mrb[0].mxu0
    %571 = vdwg.mxu0
    %v572 = vmax.f32 %v558, 0.0
    %v573 = vmax.f32 %v561, 0.0
    %v574 = vmax.f32 %v566, 0.0
    %v575 = vmax.f32 %v569, 0.0
    %v576 = vld [vmem:[#allocation14] sm:$0xf]
    %v577 = vld [vmem:[#allocation14 + $0x4] sm:$0xf]
    %v578 = vld [vmem:[#allocation14 + $0x8] sm:$0xf]
    %v579 = vld [vmem:[#allocation14 + $0xc] sm:$0xf]
    %v580 = vld [vmem:[#allocation14 + $0x10] sm:$0xf]
    %v581 = vld [vmem:[#allocation14 + $0x14] sm:$0xf]
    %v582 = vld [vmem:[#allocation14 + $0x18] sm:$0xf]
    %v583 = vld [vmem:[#allocation14 + $0x1c] sm:$0xf]
    %v584 = vld [vmem:[#allocation14 + $0x20] sm:$0xf]
    %v585 = vld [vmem:[#allocation14 + $0x24] sm:$0xf]
    %v586 = vld [vmem:[#allocation14 + $0x28] sm:$0xf]
    %v587 = vld [vmem:[#allocation14 + $0x2c] sm:$0xf]
    %v588 = vld [vmem:[#allocation14 + $0x30] sm:$0xf]
    %v589 = vld [vmem:[#allocation14 + $0x34] sm:$0xf]
    %v590 = vld [vmem:[#allocation14 + $0x38] sm:$0xf]
    %v591 = vld [vmem:[#allocation14 + $0x3c] sm:$0xf]
    %v592 = vld [vmem:[#allocation16] sm:$0x1]
    %v593 = vpack.c.bf16 %v573, %v572
    %v594 = vpack.c.bf16 %v575, %v574
    %v596 = vlaneseq
    %v597 = vshrl.u32 %v596, 7
    %v598 = vsub.s32 0, %v597
    %v599 = vrot.slane %v592, %v598
    %v617 = vunpack.c.l.b16 %v576
    %v618 = vunpack.c.l.b16 %v577
    %v619 = vunpack.c.l.b16 %v578
    %v620 = vunpack.c.l.b16 %v579
    %v621 = vunpack.c.l.b16 %v580
    %v622 = vunpack.c.l.b16 %v581
    %v623 = vunpack.c.l.b16 %v582
    %v624 = vunpack.c.l.b16 %v583
    %v625 = vunpack.c.l.b16 %v584
    %v626 = vunpack.c.l.b16 %v585
    %v627 = vunpack.c.l.b16 %v586
    %v628 = vunpack.c.l.b16 %v587
    %v629 = vunpack.c.l.b16 %v588
    %v630 = vunpack.c.l.b16 %v589
    %v631 = vunpack.c.l.b16 %v590
    %v632 = vunpack.c.l.b16 %v591
    %v633 = vpack.c.b16 %v618, %v617
    %v634 = vpack.c.b16 %v620, %v619
    %v635 = vpack.c.b16 %v622, %v621
    %v636 = vpack.c.b16 %v624, %v623
    %v637 = vpack.c.b16 %v626, %v625
    %v638 = vpack.c.b16 %v628, %v627
    %v639 = vpack.c.b16 %v630, %v629
    %v640 = vpack.c.b16 %v632, %v631
    %649 = vmatprep.subr.bf16.mxu0 0
    %650 = vmatpush1.bf16.msra.mxu0 %v633
    %651 = vmatprep.subr.bf16.mxu0 0
    %652 = vmatpush1.bf16.msra.mxu0 %v634
    %653 = vmatprep.subr.bf16.mxu0 0
    %654 = vmatpush1.bf16.msra.mxu0 %v635
    %655 = vmatprep.subr.bf16.mxu0 0
    %656 = vmatpush1.bf16.msra.mxu0 %v636
    %657 = vmatprep.subr.bf16.mxu0 0
    %658 = vmatpush1.bf16.msra.mxu0 %v637
    %659 = vmatprep.subr.bf16.mxu0 0
    %660 = vmatpush1.bf16.msra.mxu0 %v638
    %661 = vmatprep.subr.bf16.mxu0 0
    %662 = vmatpush1.bf16.msra.mxu0 %v639
    %663 = vmatprep.subr.bf16.mxu0 0
    %664 = vmatpush1.bf16.msra.mxu0 %v640
    %665 = vmatprep.subr.bf16.mxu0 0
    %666 = vmatpush1.bf16.msra.mxu0 0
    %667 = vmatprep.subr.bf16.mxu0 0
    %668 = vmatpush1.bf16.msra.mxu0 0
    %669 = vmatprep.subr.bf16.mxu0 0
    %670 = vmatpush1.bf16.msra.mxu0 0
    %671 = vmatprep.subr.bf16.mxu0 0
    %672 = vmatpush1.bf16.msra.mxu0 0
    %673 = vmatprep.subr.bf16.mxu0 0
    %674 = vmatpush1.bf16.msra.mxu0 0
    %675 = vmatprep.subr.bf16.mxu0 0
    %676 = vmatpush1.bf16.msra.mxu0 0
    %677 = vmatprep.subr.bf16.mxu0 0
    %678 = vmatpush1.bf16.msra.mxu0 0
    %679 = vmatprep.subr.bf16.mxu0 0
    %680 = vmatpush1.bf16.msra.mxu0 0
    %681 = vmatprep.mubr.bf16.mxu0 0
    %682 = vmatmul.mubr.bf16.gmra.mrb[0].mxu0 %v593
    %v683 = vpop.f32.mrb[0].mxu0
    %v684 = vadd.f32 %v599, %v683
    %v685 = vpop.f32.mrb[0].mxu0
    %v686 = vpop.f32.mrb[0].mxu0
    %v687 = vadd.f32 %v599, %v686
    %v688 = vpop.f32.mrb[0].mxu0
    %689 = vmatprep.mubr.bf16.mxu0 0
    %690 = vmatmul.mubr.bf16.gmra.mrb[0].mxu0 %v594
    %v691 = vpop.f32.mrb[0].mxu0
    %v692 = vadd.f32 %v599, %v691
    %v693 = vpop.f32.mrb[0].mxu0
    %v694 = vpop.f32.mrb[0].mxu0
    %v695 = vadd.f32 %v599, %v694
    %v696 = vpop.f32.mrb[0].mxu0
    %697 = vdwg.mxu0
    %v698 = vlaneseq
    %v699 = vand.u32 %v698, 127
    %vm700 = vcmp.lt.s32.totalorder %v699, 8
    %v701 = vsel %vm700, %v684, 0.0
    %v702 = vsel %vm700, %v687, 0.0
    %v703 = vsel %vm700, %v692, 0.0
    %v704 = vsel %vm700, %v695, 0.0
    %705 = vadd.xlane.f32.xlu0 %v701
    %v706 = vpop.xlane.xlu0 %705
    %707 = vadd.xlane.f32.xlu0 %v702
    %v708 = vpop.xlane.xlu0 %707
    %709 = vadd.xlane.f32.xlu0 %v703
    %v710 = vpop.xlane.xlu0 %709
    %711 = vadd.xlane.f32.xlu0 %v704
    %v712 = vpop.xlane.xlu0 %711
    %v713 = vmul.f32 %v706, 0.125
    %v714 = vmul.f32 %v708, 0.125
    %v715 = vmul.f32 %v710, 0.125
    %v716 = vmul.f32 %v712, 0.125
    %vm717 = vcmp.eq.s32.totalorder %v699, 127
    %v718 = vsel %vm717, %v684, 0.0
    %v719 = vsel %vm717, %v687, 0.0
    %v720 = vsel %vm717, %v692, 0.0
    %v721 = vsel %vm717, %v695, 0.0
    %722 = vadd.xlane.f32.xlu0 %v718
    %v723 = vpop.xlane.xlu0 %722
    %724 = vadd.xlane.f32.xlu0 %v719
    %v725 = vpop.xlane.xlu0 %724
    %726 = vadd.xlane.f32.xlu0 %v720
    %v727 = vpop.xlane.xlu0 %726
    %728 = vadd.xlane.f32.xlu0 %v721
    %v729 = vpop.xlane.xlu0 %728
    %v730 = vadd.f32 %v723, %v684
    %v731 = vadd.f32 %v725, %v687
    %v732 = vadd.f32 %v727, %v692
    %v733 = vadd.f32 %v729, %v695
    %v734 = vsub.f32 %v730, %v713
    %v735 = vsub.f32 %v731, %v714
    %v736 = vsub.f32 %v732, %v715
    %v737 = vsub.f32 %v733, %v716
    %v738 = vsel %vm700, %v734, 0.0
    %v739 = vsel %vm700, %v735, 0.0
    %v740 = vsel %vm700, %v736, 0.0
    %v741 = vsel %vm700, %v737, 0.0
    %v742 = vlaneseq
    %v743 = vshrl.u32 %v742, 7
    %v744 = vadd.s32 %v743, 8
    %v745 = vadd.s32 %v743, 16
    %v746 = vadd.s32 %v743, 24
    %vm747 = vcmp.lt.s32.totalorder %v743, 24
    %vm748 = vcmp.lt.s32.totalorder %v744, 24
    %vm749 = vcmp.lt.s32.totalorder %v745, 24
    %vm750 = vcmp.lt.s32.totalorder %v746, 24
    %vm751 = vmand %vm700, %vm747
    %vm752 = vmand %vm700, %vm748
    %vm753 = vmand %vm700, %vm749
    %vm754 = vmand %vm700, %vm750
    %v755 = vsel %vm751, %v738, inf
    %v756 = vsel %vm752, %v739, inf
    %v757 = vsel %vm753, %v740, inf
    %v758 = vsel %vm754, %v741, inf
    %v759 = vmin.f32 %v755, %v756
    %v760 = vmin.f32 %v757, %v758
    %v761 = vmin.f32 %v759, %v760
    %762 = vmin.xlane.f32.xlu0 %v761
    %v763 = vpop.xlane.xlu0 %762
    %v764 = vrot.slane %v763, 4
    %v765 = vmin.f32 %v763, %v764
    %v766 = vrot.slane %v765, 2
    %v767 = vmin.f32 %v765, %v766
    %v768 = vrot.slane %v767, 1
    %v769 = vmin.f32 %v767, %v768
    %s770 = vtos %v769
    %v771 = vld [vmem:[#allocation17] sm:$0xf]
    %v772 = vld [vmem:[#allocation17 + $0x4] sm:$0xf]
    %v773 = vld [vmem:[#allocation17 + $0x8] sm:$0xf]
    %v774 = vld [vmem:[#allocation17 + $0xc] sm:$0xf]
    %v775 = vunpack.c.l.bf16 %v771
    %v776 = vunpack.c.l.bf16 %v772
    %v777 = vunpack.c.l.bf16 %v773
    %v778 = vunpack.c.l.bf16 %v774
    %v779 = vld [vmem:[#allocation19] sm:$0xff]
    %v780 = vld [vmem:[#allocation19 + $0x8] sm:$0xff]
    %v781 = vld [vmem:[#allocation19 + $0x10] sm:$0xff]
    %v782 = vld [vmem:[#allocation19 + $0x18] sm:$0xff]
    %783 = vst [vmem:[#allocation20] sm:$0xff] %v572
    %784 = vst [vmem:[#allocation20 + $0x8] sm:$0xff] %v573
    %785 = vst [vmem:[#allocation20 + $0x10] sm:$0xff] %v574
    %786 = vst [vmem:[#allocation20 + $0x18] sm:$0xff] %v575
    %v787 = vadd.f32 %v738, 1.0
    %v788 = vadd.f32 %v739, 1.0
    %v789 = vadd.f32 %v740, 1.0
    %v790 = vadd.f32 %v741, 1.0
    %v791 = vstv %s770
    %v792 = vsub.f32 %v787, %v791
    %v793 = vsub.f32 %v788, %v791
    %v794 = vsub.f32 %v789, %v791
    %v795 = vsub.f32 %v790, %v791
    %v796 = vmul.f32 %v792, %v775
    %v797 = vmul.f32 %v793, %v776
    %v798 = vmul.f32 %v794, %v777
    %v799 = vmul.f32 %v795, %v778
    %800 = vmax.xlane.f32.xlu0 %v796
    %v801 = vpop.xlane.xlu0 %800
    %802 = vmax.xlane.f32.xlu0 %v797
    %v803 = vpop.xlane.xlu0 %802
    %804 = vmax.xlane.f32.xlu0 %v798
    %v805 = vpop.xlane.xlu0 %804
    %806 = vmax.xlane.f32.xlu0 %v799
    %v807 = vpop.xlane.xlu0 %806
    %vm808 = vcmp.eq.f32.partialorder %v796, %v801
    %vm809 = vcmp.eq.f32.partialorder %v797, %v803
    %vm810 = vcmp.eq.f32.partialorder %v798, %v805
    %vm811 = vcmp.eq.f32.partialorder %v799, %v807
    %v812 = vcvt.s32.f32 %v699
    %v813 = vsel %vm808, %v812, 128.0
    %v814 = vsel %vm809, %v812, 128.0
    %v815 = vsel %vm810, %v812, 128.0
    %v816 = vsel %vm811, %v812, 128.0
    %817 = vmin.xlane.f32.xlu0 %v813
    %v818 = vpop.xlane.xlu0 %817
    %819 = vmin.xlane.f32.xlu0 %v814
    %v820 = vpop.xlane.xlu0 %819
    %821 = vmin.xlane.f32.xlu0 %v815
    %v822 = vpop.xlane.xlu0 %821
    %823 = vmin.xlane.f32.xlu0 %v816
    %v824 = vpop.xlane.xlu0 %823
    %825 = vset.pattern.permute.xlu0 0
    %826 = vperm.xlu0 %825, %v779
    %v827 = vpop.permute.xlu0 %826
    %828 = vset.pattern.permute.xlu0 0
    %829 = vperm.xlu0 %828, %v780
    %v830 = vpop.permute.xlu0 %829
    %831 = vset.pattern.permute.xlu0 0
    %832 = vperm.xlu0 %831, %v781
    %v833 = vpop.permute.xlu0 %832
    %834 = vset.pattern.permute.xlu0 0
    %835 = vperm.xlu0 %834, %v782
    %v836 = vpop.permute.xlu0 %835
    %vm837 = vcmp.eq.s32.totalorder %v699, %v827
    %vm838 = vcmp.eq.s32.totalorder %v699, %v830
    %vm839 = vcmp.eq.s32.totalorder %v699, %v833
    %vm840 = vcmp.eq.s32.totalorder %v699, %v836
    %v841 = vsel %vm837, %v796, 0.0
    %v842 = vsel %vm838, %v797, 0.0
    %v843 = vsel %vm839, %v798, 0.0
    %v844 = vsel %vm840, %v799, 0.0
    %845 = vadd.xlane.f32.xlu0 %v841
    %v846 = vpop.xlane.xlu0 %845
    %847 = vadd.xlane.f32.xlu0 %v842
    %v848 = vpop.xlane.xlu0 %847
    %849 = vadd.xlane.f32.xlu0 %v843
    %v850 = vpop.xlane.xlu0 %849
    %851 = vadd.xlane.f32.xlu0 %v844
    %v852 = vpop.xlane.xlu0 %851
    %v853 = vsel %vm700, %v796, 0.0
    %v854 = vsel %vm700, %v797, 0.0
    %v855 = vsel %vm700, %v798, 0.0
    %v856 = vsel %vm700, %v799, 0.0
    %vm857 = vcmp.eq.s32.totalorder %v699, 125
    %v858 = vsel %vm857, %v818, %v853
    %v859 = vsel %vm857, %v820, %v854
    %v860 = vsel %vm857, %v822, %v855
    %v861 = vsel %vm857, %v824, %v856
    %vm862 = vcmp.eq.s32.totalorder %v699, 126
    %v863 = vsel %vm862, %v846, %v858
    %v864 = vsel %vm862, %v848, %v859
    %v865 = vsel %vm862, %v850, %v860
    %v866 = vsel %vm862, %v852, %v861
    %v867 = vsel %vm717, %v801, %v863
    %v868 = vsel %vm717, %v803, %v864
    %v869 = vsel %vm717, %v805, %v865
    %v870 = vsel %vm717, %v807, %v866
    %871 = vst [vmem:[#allocation21] sm:$0xff] %v867
    %872 = vst [vmem:[#allocation21 + $0x8] sm:$0xff] %v868
    %873 = vst [vmem:[#allocation21 + $0x10] sm:$0xff] %v869
    %874 = vst [vmem:[#allocation21 + $0x18] sm:$0xff] %v870
    // Predicated region
    $region90: #{tpu_custom_call.1} parent=1 // pred_check
      _
    $region91: #{tpu_custom_call.1} parent=1 // pred_check_branch
      %876 = sbr.rel (0) target = $region93
    $region92: #{tpu_custom_call.1} parent=1 // pred_region
      %s878 = ssub.s32 512, 512
      %879 = vsyncadd [#allocation4], %s878
      %s880 = sshll.u32 [#allocation20], 4
      %s881 = int_to_ptr.vmem [resolvable:$true] %s880
      %886 = dma.vmem_to_hbm [thread:$0]  %s881, 512, %s11, [#allocation4], 128, 128, 8
    $region93: #{tpu_custom_call.1} parent=1 // pred_fallthru
      _
    // Predicated region
    $region94: #{tpu_custom_call.1} parent=1 // pred_check
      _
    $region95: #{tpu_custom_call.1} parent=1 // pred_check_branch
      %888 = sbr.rel (0) target = $region97
    $region96: #{tpu_custom_call.1} parent=1 // pred_region
      %s890 = ssub.s32 512, 512
      %891 = vsyncadd [#allocation22], %s890
      %s892 = sshll.u32 [#allocation21], 4
      %s893 = int_to_ptr.vmem [resolvable:$true] %s892
      %898 = dma.vmem_to_hbm [thread:$0]  %s893, 512, %s12, [#allocation22], 128, 128, 8
    $region97: #{tpu_custom_call.1} parent=1 // pred_fallthru
      _
    // Predicated region
    $region98: #{tpu_custom_call.1} parent=1 // pred_check
      _
    $region99: #{tpu_custom_call.1} parent=1 // pred_check_branch
      %900 = sbr.rel (0) target = $region101
    $region100: #{tpu_custom_call.1} parent=1 // pred_region
      %901 = dma.done [#allocation4], 512
    $region101: #{tpu_custom_call.1} parent=1 // pred_fallthru
      _
    // Predicated region
    $region102: #{tpu_custom_call.1} parent=1 // pred_check
      _
    $region103: #{tpu_custom_call.1} parent=1 // pred_check_branch
      %903 = sbr.rel (0) target = $region105
    $region104: #{tpu_custom_call.1} parent=1 // pred_region
      %904 = dma.done [#allocation22], 512
    $region105: #{tpu_custom_call.1} parent=1 // pred_fallthru
      _
    %905 = vsyncpa [#allocation3], 1
    %906 = vsyncpa [#allocation6], 1
    %907 = vsyncpa [#allocation9], 1
    %908 = vsyncpa [#allocation12], 1
    %909 = vsyncpa [#allocation15], 1
    %910 = vsyncpa [#allocation18], 1
    %911 = vsyncpa [#allocation4], 1
    %912 = vsyncpa [#allocation22], 1

</llo_original>
